<compile_context>
chip_gen: v7x
topology: tpu7x:2x2x1
jax: 0.10.0
libtpu: 0.0.40
codegen_flags: <defaults>
</compile_context>

<pallas_src>
import math
from typing import NamedTuple

import jax
import jax.numpy as jnp
from jax.experimental import pallas as pl
from jax.experimental.pallas import tpu as pltpu

LANE = 128


def _round_up(x, m):
    return (x + m - 1) // m * m


def _vmem_limit_bytes():
    # 3/4 of physical per-core VMEM: 96 MiB on v5e/v6e (128 MiB), 48 MiB on v7x
    # (64 MiB per TensorCore). Conservative 48 MiB fallback if the query fails.
    try:
        phys = pltpu.get_tpu_info().vmem_capacity_bytes
    except Exception:
        phys = 64 * 1024 * 1024
    return int(phys * 3 // 4)


class PackedFFNParams(NamedTuple):
    w12: jax.Array   # (dmp, 2*dfp)  [W1 | W2], compute dtype
    b12: jax.Array   # (1, 2*dfp)    [b1 | b2], float32
    wo: jax.Array    # (dfp, dmp)    compute dtype
    bo: jax.Array    # (1, dmp)      float32
    d_model: int
    d_ff: int


def pack_ffn_params(params, *, compute_dtype=jnp.bfloat16):
    """One-time weight prep: lane-pad, fuse [W1|W2], cast.

    Hoisted out of feed_forward so callers pay the pad/concat/cast HBM pass once
    (at parameter load), not on every forward call. Zero padding is exact:
    padded gate columns give sigmoid(0) * 0 = 0 and padded Wo rows/cols are
    zero, so the valid output slice is unchanged.
    """
    w1, b1, w2, b2, wo, bo = params
    d_model, d_ff = w1.shape
    dmp = _round_up(d_model, LANE)
    dfp = _round_up(d_ff, LANE)
    f = compute_dtype
    pad_w = ((0, dmp - d_model), (0, dfp - d_ff))
    pad_b = ((0, 0), (0, dfp - d_ff))
    w12 = jnp.concatenate([jnp.pad(w1, pad_w), jnp.pad(w2, pad_w)], axis=1).astype(f)
    b12 = jnp.concatenate(
        [jnp.pad(jnp.reshape(b1, (1, d_ff)), pad_b),
         jnp.pad(jnp.reshape(b2, (1, d_ff)), pad_b)], axis=1).astype(jnp.float32)
    wo_p = jnp.pad(wo, ((0, dfp - d_ff), (0, dmp - d_model))).astype(f)
    bo_p = jnp.pad(jnp.reshape(bo, (1, d_model)),
                   ((0, 0), (0, dmp - d_model))).astype(jnp.float32)
    return PackedFFNParams(w12, b12, wo_p, bo_p, d_model, d_ff)


# ----------------------------------------------------------------------------
# Kernels
# ----------------------------------------------------------------------------
def ffn_resident_kernel(x_ref, w12_ref, b12_ref, wo_ref, bo_ref, o_ref):
    """Weights resident in VMEM; one wide [W1|W2] matmul + gated second matmul."""
    x = x_ref[...]
    h12 = jnp.dot(x, w12_ref[...], preferred_element_type=jnp.float32) + b12_ref[...]
    dfp = w12_ref.shape[1] // 2
    h1 = h12[:, :dfp]
    gate = jax.nn.sigmoid(h12[:, dfp:])          # transcendental -> EUP slot
    h = (h1 * gate).astype(wo_ref.dtype)
    # TODO(synk): nn.Dropout is identity here (inference mode); training mode
    # would seed pltpu.prng_seed with pl.program_id(0) and mask via
    # pltpu.prng_random_bits so token tiles get independent masks.
    out = jnp.dot(h, wo_ref[...], preferred_element_type=jnp.float32) + bo_ref[...]
    o_ref[...] = out.astype(o_ref.dtype)


def ffn_stream_kernel(x_ref, w1_ref, w2_ref, b1_ref, b2_ref, wo_ref, bo_ref,
                      o_ref, acc_ref):
    """d_ff streamed in tf-wide chunks (grid axis 1, "arbitrary"); f32 VMEM acc."""
    k = pl.program_id(1)

    @pl.when(k == 0)
    def _():
        acc_ref[...] = jnp.zeros_like(acc_ref)

    x = x_ref[...]
    h1 = jnp.dot(x, w1_ref[...], preferred_element_type=jnp.float32) + b1_ref[...]
    gate = jax.nn.sigmoid(
        jnp.dot(x, w2_ref[...], preferred_element_type=jnp.float32) + b2_ref[...])
    h = (h1 * gate).astype(wo_ref.dtype)
    acc_ref[...] += jnp.dot(h, wo_ref[...], preferred_element_type=jnp.float32)

    @pl.when(k == pl.num_programs(1) - 1)
    def _():
        o_ref[...] = (acc_ref[...] + bo_ref[...]).astype(o_ref.dtype)


# ----------------------------------------------------------------------------
# Wrapper
# ----------------------------------------------------------------------------
def feed_forward(x, packed: PackedFFNParams, *, tm=512, tf=512, out_dtype=None,
                 x_buffers=2, force_stream=None):
    """x: (batch, seq, d_model) -> (batch, seq, d_model) in out_dtype.

    out_dtype defaults to the packed compute dtype (bf16 fast path) to avoid an
    f32 writeback in the memory-bound regime; pass out_dtype=jnp.float32 if the
    downstream consumer needs f32 output.
    """
    w12, b12, wo_p, bo_p, d_model, d_ff = packed
    assert x.shape[-1] == d_model
    B, S, _ = x.shape
    M = B * S
    dfp, dmp = wo_p.shape
    f = w12.dtype
    out_dtype = f if out_dtype is None else out_dtype

    # Token tiling: 16-row alignment for bf16 (full sublane packing), 8 for f32.
    row_align = 16 if f == jnp.bfloat16 else 8
    tm = max(row_align, min(tm, _round_up(M, row_align)))
    Mp = _round_up(M, tm)

    # Only pad / copy activations when actually needed.
    x2d = x.reshape(M, d_model)
    if x2d.dtype != f:
        x2d = x2d.astype(f)
    if (Mp, dmp) != (M, d_model):
        x2d = jnp.pad(x2d, ((0, Mp - M), (0, dmp - d_model)))

    vmem_limit = _vmem_limit_bytes()
    weight_bytes = (w12.size + wo_p.size) * w12.dtype.itemsize
    stream = (weight_bytes > int(0.6 * vmem_limit)) if force_stream is None \
        else bool(force_stream)

    cost = pl.CostEstimate(
        flops=int(2 * Mp * dmp * 2 * dfp + 2 * Mp * dfp * dmp),
        transcendentals=int(Mp * dfp),
        bytes_accessed=int(Mp * dmp * x2d.dtype.itemsize            # x
                           + 3 * dmp * dfp * w12.dtype.itemsize     # [W1|W2], Wo
                           + (2 * dfp + dmp) * 4                    # biases (f32)
                           + Mp * dmp * jnp.dtype(out_dtype).itemsize))

    if not stream:
        # Resident path: weights fetched once, single-buffered (Buffered(1));
        # only x / out tiles stream with the token grid.
        # NOTE (v7x megacore): the 2x TC speedup needs >= 2 (ideally even) token
        # tiles; weight residency budget applies per TensorCore.
        out2d = pl.pallas_call(
            ffn_resident_kernel,
            out_shape=jax.ShapeDtypeStruct((Mp, dmp), out_dtype),
            grid_spec=pltpu.PrefetchScalarGridSpec(
                num_scalar_prefetch=0,
                grid=(Mp // tm,),
                in_specs=[
                    pl.BlockSpec((tm, dmp), lambda i: (i, 0),
                                 pipeline_mode=pl.Buffered(x_buffers)),
                    pl.BlockSpec((dmp, 2 * dfp), lambda i: (0, 0),
                                 pipeline_mode=pl.Buffered(1)),
                    pl.BlockSpec((1, 2 * dfp), lambda i: (0, 0),
                                 pipeline_mode=pl.Buffered(1)),
                    pl.BlockSpec((dfp, dmp), lambda i: (0, 0),
                                 pipeline_mode=pl.Buffered(1)),
                    pl.BlockSpec((1, dmp), lambda i: (0, 0),
                                 pipeline_mode=pl.Buffered(1)),
                ],
                out_specs=pl.BlockSpec((tm, dmp), lambda i: (i, 0)),
            ),
            compiler_params=pltpu.CompilerParams(
                dimension_semantics=("parallel",),
                vmem_limit_bytes=vmem_limit),
            cost_estimate=cost,
        )(x2d, w12, b12, wo_p, bo_p)
    else:
        # Streamed path: d_ff tiled in tf-wide chunks (reduction axis last,
        # "arbitrary"), f32 accumulator in VMEM, bo added at finalize.
        tf = min(_round_up(tf, LANE), dfp)
        while dfp % tf:
            tf -= LANE
        n_k = dfp // tf
        out2d = pl.pallas_call(
            ffn_stream_kernel,
            out_shape=jax.ShapeDtypeStruct((Mp, dmp), out_dtype),
            grid_spec=pltpu.PrefetchScalarGridSpec(
                num_scalar_prefetch=0,
                grid=(Mp // tm, n_k),
                in_specs=[
                    pl.BlockSpec((tm, dmp), lambda i, k: (i, 0),
                                 pipeline_mode=pl.Buffered(x_buffers)),
                    # W1 / W2 column chunks streamed from the same fused array
                    # (passed twice with different index_maps).
                    pl.BlockSpec((dmp, tf), lambda i, k: (0, k)),
                    pl.BlockSpec((dmp, tf), lambda i, k: (0, k + n_k)),
                    pl.BlockSpec((1, tf), lambda i, k: (0, k)),
                    pl.BlockSpec((1, tf), lambda i, k: (0, k + n_k)),
                    pl.BlockSpec((tf, dmp), lambda i, k: (k, 0)),
                    pl.BlockSpec((1, dmp), lambda i, k: (0, 0),
                                 pipeline_mode=pl.Buffered(1)),
                ],
                out_specs=pl.BlockSpec((tm, dmp), lambda i, k: (i, 0)),
                scratch_shapes=[pltpu.VMEM((tm, dmp), jnp.float32)],
            ),
            compiler_params=pltpu.CompilerParams(
                dimension_semantics=("parallel", "arbitrary"),
                vmem_limit_bytes=vmem_limit),
            cost_estimate=cost,
        )(x2d, w12, w12, b12, b12, wo_p, bo_p)

    if (Mp, dmp) != (M, d_model):
        out2d = out2d[:M, :d_model]
    return out2d.reshape(B, S, d_model)


# ----------------------------------------------------------------------------
# Reference / init / test
# ----------------------------------------------------------------------------
def init_params(key, d_model, d_ff):
    """nn.Linear-style init (uniform +-1/sqrt(fan_in)); weights stored transposed
    as (in_features, out_features)."""
    k1, k2, k3, k4, k5, k6 = jax.random.split(key, 6)
    bound1 = 1.0 / math.sqrt(d_model)
    bound2 = 1.0 / math.sqrt(d_ff)
    w1 = jax.random.uniform(k1, (d_model, d_ff), jnp.float32, -bound1, bound1)
    b1 = jax.random.uniform(k2, (1, d_ff), jnp.float32, -bound1, bound1)
    w2 = jax.random.uniform(k3, (d_model, d_ff), jnp.float32, -bound1, bound1)
    b2 = jax.random.uniform(k4, (1, d_ff), jnp.float32, -bound1, bound1)
    wo = jax.random.uniform(k5, (d_ff, d_model), jnp.float32, -bound2, bound2)
    bo = jax.random.uniform(k6, (1, d_model), jnp.float32, -bound2, bound2)
    return (w1, b1, w2, b2, wo, bo)


def feed_forward_ref(x, params):
    """Pure-JAX f32 reference (dropout = identity / eval mode)."""
    w1, b1, w2, b2, wo, bo = params
    gate = jax.nn.sigmoid(x @ w2 + b2)
    h = (x @ w1 + b1) * gate
    return h @ wo + bo


if __name__ == "__main__":
    d_model, d_ff = 32, 64
    B, S = 2, 8

    key = jax.random.PRNGKey(0)
    kx, kp, kp2 = jax.random.split(key, 3)
    x = jax.random.normal(kx, (B, S, d_model), jnp.float32)
    params = init_params(kp, d_model, d_ff)
    ref = feed_forward_ref(x, params)

    # 1) f32 compute, resident-weight path: tight structural check.
    packed_f32 = pack_ffn_params(params, compute_dtype=jnp.float32)
    out_f32 = jax.block_until_ready(feed_forward(x, packed_f32))
    assert out_f32.shape == (B, S, d_model)
    assert jnp.allclose(out_f32, ref, atol=1e-5, rtol=1e-5), "f32 resident mismatch"

    # 2) bf16 fast path (default): bf16 weights/activations/output, f32 MXU acc.
    packed_bf16 = pack_ffn_params(params)
    out_bf16 = jax.block_until_ready(feed_forward(x, packed_bf16))
    assert out_bf16.shape == (B, S, d_model)
    assert out_bf16.dtype == jnp.bfloat16
    assert jnp.allclose(out_bf16.astype(jnp.float32), ref, atol=5e-2, rtol=5e-2), \
        "bf16 resident mismatch"

    # 3) Streamed d_ff path (forced, tf=128 -> 2 reduction steps), f32 compute.
    d_ff_big = 256
    params_big = init_params(kp2, d_model, d_ff_big)
    ref_big = feed_forward_ref(x, params_big)
    packed_big = pack_ffn_params(params_big, compute_dtype=jnp.float32)
    out_stream = jax.block_until_ready(
        feed_forward(x, packed_big, tf=128, force_stream=True,
                     out_dtype=jnp.float32))
    assert out_stream.shape == (B, S, d_model)
    assert jnp.allclose(out_stream, ref_big, atol=1e-4, rtol=1e-4), \
        "f32 streamed mismatch"

    print("KERNEL_OK")
</pallas_src>

<mosaic_0001>
module attributes {stable_mosaic.version = 11 : i64} {
  func.func @ffn_resident_kernel(%arg0: i32, %arg1: memref<16x128xf32, #tpu.memory_space<vmem>>, %arg2: memref<128x256xf32, #tpu.memory_space<vmem>>, %arg3: memref<1x256xf32, #tpu.memory_space<vmem>>, %arg4: memref<128x128xf32, #tpu.memory_space<vmem>>, %arg5: memref<1x128xf32, #tpu.memory_space<vmem>>, %arg6: memref<16x128xf32, #tpu.memory_space<vmem>>) attributes {dimension_semantics = [#tpu.dimension_semantics<parallel>], iteration_bounds = array<i64: 1>, scalar_prefetch = 0 : i64, scratch_operands = 0 : i64, tpu.core_type = #tpu.core_type<tc>, window_params = [{pipeline_mode = #tpu.pipeline_mode<double_buffered>, transform_indices = @transform_0, window_bounds = array<i64: 16, 128>}, {pipeline_mode = #tpu.pipeline_mode<synchronous>, transform_indices = @transform_1, window_bounds = array<i64: 128, 256>}, {pipeline_mode = #tpu.pipeline_mode<synchronous>, transform_indices = @transform_2, window_bounds = array<i64: 1, 256>}, {pipeline_mode = #tpu.pipeline_mode<synchronous>, transform_indices = @transform_3, window_bounds = array<i64: 128, 128>}, {pipeline_mode = #tpu.pipeline_mode<synchronous>, transform_indices = @transform_4, window_bounds = array<i64: 1, 128>}, {transform_indices = @transform_5, window_bounds = array<i64: 16, 128>}]} {
    %c0 = arith.constant 0 : index
    %c0_0 = arith.constant 0 : index
    %0 = vector.load %arg1[%c0, %c0_0] : memref<16x128xf32, #tpu.memory_space<vmem>>, vector<16x128xf32>
    %c0_1 = arith.constant 0 : index
    %c0_2 = arith.constant 0 : index
    %1 = vector.load %arg2[%c0_1, %c0_2] : memref<128x256xf32, #tpu.memory_space<vmem>>, vector<128x256xf32>
    %cst = arith.constant dense<0.000000e+00> : vector<16x256xf32>
    %2 = tpu.matmul %0, %1, %cst {dimension_numbers = #tpu.dot_dimension_numbers<[1], [0], [0], [1], [0, 0, 1, 1], [], []>} : vector<16x128xf32>, vector<128x256xf32>, vector<16x256xf32> -> vector<16x256xf32>
    %c0_3 = arith.constant 0 : index
    %c0_4 = arith.constant 0 : index
    %3 = vector.load %arg3[%c0_3, %c0_4] : memref<1x256xf32, #tpu.memory_space<vmem>>, vector<1x256xf32>
    %4 = vector.broadcast %3 : vector<1x256xf32> to vector<16x256xf32>
    %5 = arith.addf %2, %4 : vector<16x256xf32>
    %6 = vector.extract_strided_slice %5 {offsets = [0, 0], sizes = [16, 128], strides = [1, 1]} : vector<16x256xf32> to vector<16x128xf32>
    %7 = vector.extract_strided_slice %5 {offsets = [0, 128], sizes = [16, 128], strides = [1, 1]} : vector<16x256xf32> to vector<16x128xf32>
    %8 = arith.negf %7 : vector<16x128xf32>
    %9 = math.exp %8 : vector<16x128xf32>
    %cst_5 = arith.constant 1.000000e+00 : f32
    %10 = vector.broadcast %cst_5 : f32 to vector<16x128xf32>
    %11 = arith.addf %10, %9 : vector<16x128xf32>
    %12 = arith.divf %10, %11 : vector<16x128xf32>
    %13 = arith.mulf %6, %12 : vector<16x128xf32>
    %c0_6 = arith.constant 0 : index
    %c0_7 = arith.constant 0 : index
    %14 = vector.load %arg4[%c0_6, %c0_7] : memref<128x128xf32, #tpu.memory_space<vmem>>, vector<128x128xf32>
    %cst_8 = arith.constant dense<0.000000e+00> : vector<16x128xf32>
    %15 = tpu.matmul %13, %14, %cst_8 {dimension_numbers = #tpu.dot_dimension_numbers<[1], [0], [0], [1], [0, 0, 1, 1], [], []>} : vector<16x128xf32>, vector<128x128xf32>, vector<16x128xf32> -> vector<16x128xf32>
    %c0_9 = arith.constant 0 : index
    %c0_10 = arith.constant 0 : index
    %16 = vector.load %arg5[%c0_9, %c0_10] : memref<1x128xf32, #tpu.memory_space<vmem>>, vector<1x128xf32>
    %17 = vector.broadcast %16 : vector<1x128xf32> to vector<16x128xf32>
    %18 = arith.addf %15, %17 : vector<16x128xf32>
    %c0_11 = arith.constant 0 : index
    %c0_12 = arith.constant 0 : index
    %19 = vector.load %arg6[%c0_11, %c0_12] : memref<16x128xf32, #tpu.memory_space<vmem>>, vector<16x128xf32>
    tpu.vector_store %arg6[%c0_11, %c0_12], %18 {strides = array<i32>} : memref<16x128xf32, #tpu.memory_space<vmem>>, vector<16x128xf32>,
    return
  }
  func.func @transform_0(%arg0: i32) -> (i32, i32) {
    %c0_i32 = arith.constant 0 : i32
    %c0_i32_0 = arith.constant 0 : i32
    return %arg0, %c0_i32 : i32, i32
  }
  func.func @transform_1(%arg0: i32) -> (i32, i32) {
    %c0_i32 = arith.constant 0 : i32
    %c0_i32_0 = arith.constant 0 : i32
    %c0_i32_1 = arith.constant 0 : i32
    return %c0_i32, %c0_i32_0 : i32, i32
  }
  func.func @transform_2(%arg0: i32) -> (i32, i32) {
    %c0_i32 = arith.constant 0 : i32
    %c0_i32_0 = arith.constant 0 : i32
    %c0_i32_1 = arith.constant 0 : i32
    return %c0_i32, %c0_i32_0 : i32, i32
  }
  func.func @transform_3(%arg0: i32) -> (i32, i32) {
    %c0_i32 = arith.constant 0 : i32
    %c0_i32_0 = arith.constant 0 : i32
    %c0_i32_1 = arith.constant 0 : i32
    return %c0_i32, %c0_i32_0 : i32, i32
  }
  func.func @transform_4(%arg0: i32) -> (i32, i32) {
    %c0_i32 = arith.constant 0 : i32
    %c0_i32_0 = arith.constant 0 : i32
    %c0_i32_1 = arith.constant 0 : i32
    return %c0_i32, %c0_i32_0 : i32, i32
  }
  func.func @transform_5(%arg0: i32) -> (i32, i32) {
    %c0_i32 = arith.constant 0 : i32
    %c0_i32_0 = arith.constant 0 : i32
    return %arg0, %c0_i32 : i32, i32
  }
}

</mosaic_0001>

<llo_original>
// kernel: tpu_custom_call.1
$region0: #{tpu_custom_call.1}
  #allocation0 [shape = 'u32[]', space=smem, size = 0x4, offset = 0x4, fixed_abs, tag = 'smem constant byte address 0x4 - core index']
  #allocation1 [shape = 'u32[144,128]{1,0:T(1,128)}', space=vmem, size = 0x12000, scoped, tag = 'internal scratch']
  %s0 = inlined_call_operand.hbm [shape: f32[16,128], index: 0, kind: input, shape index: {}]
  %s1 = inlined_call_operand.hbm [shape: f32[128,256], index: 1, kind: input, shape index: {}]
  %s2 = inlined_call_operand.vmem [shape: f32[1,256], index: 2, kind: input, shape index: {}]
  %s3 = inlined_call_operand.hbm [shape: f32[128,128], index: 3, kind: input, shape index: {}]
  %s4 = inlined_call_operand.vmem [shape: f32[1,128], index: 4, kind: input, shape index: {}]
  %s5 = inlined_call_operand.hbm [shape: f32[16,128], index: 5, kind: output, shape index: {}]
  %s6 = sld [smem:[#allocation0]]
  $region42: #{tpu_custom_call.1} parent=0
    _
  %s8 = ssub.s32 1, %s6
  %s9 = scalar_select 0, %s8, %s6
  $region1: #{tpu_custom_call.1} parent=0
    #allocation2 [shape = 'u8[8192]{0}', space=vmem, size = 0x2000, scoped, tag = 'input window, operand 0, single buffered']
    #allocation3 [shape = 's32[1]{0}', space=sflag, size = 0x4, scoped, tag = 'scoped memory for tpu_custom_call.1']
    #allocation4 [shape = 's32[1]{0}', space=sflag, size = 0x4, scoped, tag = 'scoped memory for tpu_custom_call.1']
    #allocation5 [shape = 'u8[131072]{0}', space=vmem, size = 0x20000, scoped, tag = 'input window, operand 1, single buffered']
    #allocation6 [shape = 's32[1]{0}', space=sflag, size = 0x4, scoped, tag = 'scoped memory for tpu_custom_call.1']
    #allocation7 [shape = 'u8[65536]{0}', space=vmem, size = 0x10000, scoped, tag = 'input window, operand 3, single buffered']
    #allocation8 [shape = 'u8[8192]{0}', space=vmem, size = 0x2000, scoped, tag = 'output window, operand 0, single buffered']
    %10 = vsyncpa [#allocation3], 0
    %11 = vsyncpa [#allocation6], 0
    %12 = vsyncpa [#allocation4], 0
    // Predicated region
    $region2: #{tpu_custom_call.1} parent=1 // pred_check
      _
    $region3: #{tpu_custom_call.1} parent=1 // pred_check_branch
      %14 = sbr.rel (0) target = $region5
    $region4: #{tpu_custom_call.1} parent=1 // pred_region
      %s16 = ssub.s32 256, 256
      %17 = vsyncadd [#allocation3], %s16
      %s18 = sshll.u32 [#allocation2], 4
      %s19 = int_to_ptr.vmem [resolvable:$true] %s18
      %24 = dma.hbm_to_vmem [thread:$0]  %s0, 256, %s19, [#allocation3], 128, 128, 8
    $region5: #{tpu_custom_call.1} parent=1 // pred_fallthru
      _
    // Predicated region
    $region6: #{tpu_custom_call.1} parent=1 // pred_check
      _
    $region7: #{tpu_custom_call.1} parent=1 // pred_check_branch
      %26 = sbr.rel (0) target = $region9
    $region8: #{tpu_custom_call.1} parent=1 // pred_region
      %s28 = ssub.s32 4096, 4096
      %29 = vsyncadd [#allocation6], %s28
      %s30 = sshll.u32 [#allocation5], 4
      %s31 = int_to_ptr.vmem [resolvable:$true] %s30
      %36 = dma.hbm_to_vmem [thread:$0]  %s1, 4096, %s31, [#allocation6], 256, 256, 16
    $region9: #{tpu_custom_call.1} parent=1 // pred_fallthru
      _
    // Predicated region
    $region10: #{tpu_custom_call.1} parent=1 // pred_check
      _
    $region11: #{tpu_custom_call.1} parent=1 // pred_check_branch
      %38 = sbr.rel (0) target = $region13
    $region12: #{tpu_custom_call.1} parent=1 // pred_region
      _
    $region13: #{tpu_custom_call.1} parent=1 // pred_fallthru
      _
    // Predicated region
    $region14: #{tpu_custom_call.1} parent=1 // pred_check
      _
    $region15: #{tpu_custom_call.1} parent=1 // pred_check_branch
      %40 = sbr.rel (0) target = $region17
    $region16: #{tpu_custom_call.1} parent=1 // pred_region
      %s42 = ssub.s32 2048, 2048
      %43 = vsyncadd [#allocation6], %s42
      %s44 = sshll.u32 [#allocation7], 4
      %s45 = int_to_ptr.vmem [resolvable:$true] %s44
      %50 = dma.hbm_to_vmem [thread:$0]  %s3, 2048, %s45, [#allocation6], 128, 128, 8
    $region17: #{tpu_custom_call.1} parent=1 // pred_fallthru
      _
    // Predicated region
    $region18: #{tpu_custom_call.1} parent=1 // pred_check
      _
    $region19: #{tpu_custom_call.1} parent=1 // pred_check_branch
      %52 = sbr.rel (0) target = $region21
    $region20: #{tpu_custom_call.1} parent=1 // pred_region
      _
    $region21: #{tpu_custom_call.1} parent=1 // pred_fallthru
      _
    // Predicated region
    $region22: #{tpu_custom_call.1} parent=1 // pred_check
      _
    $region23: #{tpu_custom_call.1} parent=1 // pred_check_branch
      %54 = sbr.rel (0) target = $region25
    $region24: #{tpu_custom_call.1} parent=1 // pred_region
      %55 = dma.done [#allocation3], 256
    $region25: #{tpu_custom_call.1} parent=1 // pred_fallthru
      _
    // Predicated region
    $region26: #{tpu_custom_call.1} parent=1 // pred_check
      _
    $region27: #{tpu_custom_call.1} parent=1 // pred_check_branch
      %57 = sbr.rel (0) target = $region29
    $region28: #{tpu_custom_call.1} parent=1 // pred_region
      %58 = dma.done [#allocation6], 4096
    $region29: #{tpu_custom_call.1} parent=1 // pred_fallthru
      _
    // Predicated region
    $region30: #{tpu_custom_call.1} parent=1 // pred_check
      _
    $region31: #{tpu_custom_call.1} parent=1 // pred_check_branch
      %60 = sbr.rel (0) target = $region33
    $region32: #{tpu_custom_call.1} parent=1 // pred_region
      %61 = dma.done [#allocation6], 2048
    $region33: #{tpu_custom_call.1} parent=1 // pred_fallthru
      _
    %v62 = vld [vmem:[#allocation2] sm:$0xff]
    %v63 = vld [vmem:[#allocation2 + $0x8] sm:$0xff]
    %v64 = vld [vmem:[#allocation5] sm:$0xff]
    %v65 = vld [vmem:[#allocation5 + $0x8] sm:$0xff]
    %v66 = vld [vmem:[#allocation5 + $0x10] sm:$0xff]
    %v67 = vld [vmem:[#allocation5 + $0x18] sm:$0xff]
    %v68 = vld [vmem:[#allocation5 + $0x20] sm:$0xff]
    %v69 = vld [vmem:[#allocation5 + $0x28] sm:$0xff]
    %v70 = vld [vmem:[#allocation5 + $0x30] sm:$0xff]
    %v71 = vld [vmem:[#allocation5 + $0x38] sm:$0xff]
    %v72 = vld [vmem:[#allocation5 + $0x40] sm:$0xff]
    %v73 = vld [vmem:[#allocation5 + $0x48] sm:$0xff]
    %v74 = vld [vmem:[#allocation5 + $0x50] sm:$0xff]
    %v75 = vld [vmem:[#allocation5 + $0x58] sm:$0xff]
    %v76 = vld [vmem:[#allocation5 + $0x60] sm:$0xff]
    %v77 = vld [vmem:[#allocation5 + $0x68] sm:$0xff]
    %v78 = vld [vmem:[#allocation5 + $0x70] sm:$0xff]
    %v79 = vld [vmem:[#allocation5 + $0x78] sm:$0xff]
    %v80 = vld [vmem:[#allocation5 + $0x80] sm:$0xff]
    %v81 = vld [vmem:[#allocation5 + $0x88] sm:$0xff]
    %v82 = vld [vmem:[#allocation5 + $0x90] sm:$0xff]
    %v83 = vld [vmem:[#allocation5 + $0x98] sm:$0xff]
    %v84 = vld [vmem:[#allocation5 + $0xa0] sm:$0xff]
    %v85 = vld [vmem:[#allocation5 + $0xa8] sm:$0xff]
    %v86 = vld [vmem:[#allocation5 + $0xb0] sm:$0xff]
    %v87 = vld [vmem:[#allocation5 + $0xb8] sm:$0xff]
    %v88 = vld [vmem:[#allocation5 + $0xc0] sm:$0xff]
    %v89 = vld [vmem:[#allocation5 + $0xc8] sm:$0xff]
    %v90 = vld [vmem:[#allocation5 + $0xd0] sm:$0xff]
    %v91 = vld [vmem:[#allocation5 + $0xd8] sm:$0xff]
    %v92 = vld [vmem:[#allocation5 + $0xe0] sm:$0xff]
    %v93 = vld [vmem:[#allocation5 + $0xe8] sm:$0xff]
    %v94 = vld [vmem:[#allocation5 + $0xf0] sm:$0xff]
    %v95 = vld [vmem:[#allocation5 + $0xf8] sm:$0xff]
    %v96 = vld [vmem:[%s2] sm:$0x3]
    %v98 = vlaneseq
    %v99 = vshrl.u32 %v98, 7
    %v100 = vsub.s32 0, %v99
    %v101 = vrot.slane %v96, %v100
    %v102 = vlaneseq
    %v103 = vshrl.u32 %v102, 7
    %v104 = vsub.s32 1, %v103
    %v105 = vrot.slane %v96, %v104
    %108 = vmatprep.subr.mxu0 %v65
    %109 = vmatpush1.msra.mxu0 %v64
    %110 = vmatprep.subr.mxu0 %v67
    %111 = vmatpush1.msra.mxu0 %v66
    %112 = vmatprep.subr.mxu0 %v69
    %113 = vmatpush1.msra.mxu0 %v68
    %114 = vmatprep.subr.mxu0 %v71
    %115 = vmatpush1.msra.mxu0 %v70
    %116 = vmatprep.subr.mxu0 %v73
    %117 = vmatpush1.msra.mxu0 %v72
    %118 = vmatprep.subr.mxu0 %v75
    %119 = vmatpush1.msra.mxu0 %v74
    %120 = vmatprep.subr.mxu0 %v77
    %121 = vmatpush1.msra.mxu0 %v76
    %122 = vmatprep.subr.mxu0 %v79
    %123 = vmatpush1.msra.mxu0 %v78
    %124 = vmatprep.subr.mxu0 %v81
    %125 = vmatpush1.msra.mxu0 %v80
    %126 = vmatprep.subr.mxu0 %v83
    %127 = vmatpush1.msra.mxu0 %v82
    %128 = vmatprep.subr.mxu0 %v85
    %129 = vmatpush1.msra.mxu0 %v84
    %130 = vmatprep.subr.mxu0 %v87
    %131 = vmatpush1.msra.mxu0 %v86
    %132 = vmatprep.subr.mxu0 %v89
    %133 = vmatpush1.msra.mxu0 %v88
    %134 = vmatprep.subr.mxu0 %v91
    %135 = vmatpush1.msra.mxu0 %v90
    %136 = vmatprep.subr.mxu0 %v93
    %137 = vmatpush1.msra.mxu0 %v92
    %138 = vmatprep.subr.mxu0 %v95
    %139 = vmatpush1.msra.mxu0 %v94
    %140 = vmatprep.subr.mxu0 0.0
    %141 = vmatpush1.msra.mxu0 0.0
    %142 = vmatprep.subr.mxu0 0.0
    %143 = vmatpush1.msra.mxu0 0.0
    %144 = vmatprep.subr.mxu0 0.0
    %145 = vmatpush1.msra.mxu0 0.0
    %146 = vmatprep.subr.mxu0 0.0
    %147 = vmatpush1.msra.mxu0 0.0
    %148 = vmatprep.subr.mxu0 0.0
    %149 = vmatpush1.msra.mxu0 0.0
    %150 = vmatprep.subr.mxu0 0.0
    %151 = vmatpush1.msra.mxu0 0.0
    %152 = vmatprep.subr.mxu0 0.0
    %153 = vmatpush1.msra.mxu0 0.0
    %154 = vmatprep.subr.mxu0 0.0
    %155 = vmatpush1.msra.mxu0 0.0
    %156 = vmatprep.subr.mxu0 0.0
    %157 = vmatpush1.msra.mxu0 0.0
    %158 = vmatprep.subr.mxu0 0.0
    %159 = vmatpush1.msra.mxu0 0.0
    %160 = vmatprep.subr.mxu0 0.0
    %161 = vmatpush1.msra.mxu0 0.0
    %162 = vmatprep.subr.mxu0 0.0
    %163 = vmatpush1.msra.mxu0 0.0
    %164 = vmatprep.subr.mxu0 0.0
    %165 = vmatpush1.msra.mxu0 0.0
    %166 = vmatprep.subr.mxu0 0.0
    %167 = vmatpush1.msra.mxu0 0.0
    %168 = vmatprep.subr.mxu0 0.0
    %169 = vmatpush1.msra.mxu0 0.0
    %170 = vmatprep.subr.mxu0 0.0
    %171 = vmatpush1.msra.mxu0 0.0
    %172 = vmatprep.mubr.f32.mxu0 0.0
    %173 = vmatmul.mubr.f32.gmra.mrb[0].mxu0 %v62
    %v174 = vpop.f32.mrb[0].mxu0
    %v175 = vadd.f32 %v101, %v174
    %v176 = vpop.f32.mrb[0].mxu0
    %v177 = vadd.f32 %v105, %v176
    %178 = vmatprep.mubr.f32.mxu0 0.0
    %179 = vmatmul.mubr.f32.gmra.mrb[0].mxu0 %v63
    %v180 = vpop.f32.mrb[0].mxu0
    %v181 = vadd.f32 %v101, %v180
    %v182 = vpop.f32.mrb[0].mxu0
    %v183 = vadd.f32 %v105, %v182
    %184 = vdwg.mxu0
    %v185 = vxor.u32 %v177, 2147483648
    %v186 = vxor.u32 %v183, 2147483648
    %v187 = vmul.f32 %v185, 1.442695
    %v188 = vpow.pop %v187
    %v189 = vmul.f32 %v186, 1.442695
    %v190 = vpow.pop %v189
    %v191 = vadd.f32 %v188, 1.0
    %v192 = vadd.f32 %v190, 1.0
    %v193 = vrcp.pop %v191
    %v194 = vmul.f32 1.0, %v193
    %v195 = vrcp.pop %v192
    %v196 = vmul.f32 1.0, %v195
    %v197 = vmul.f32 %v175, %v194
    %v198 = vmul.f32 %v181, %v196
    %v199 = vld [vmem:[#allocation7] sm:$0xff]
    %v200 = vld [vmem:[#allocation7 + $0x8] sm:$0xff]
    %v201 = vld [vmem:[#allocation7 + $0x10] sm:$0xff]
    %v202 = vld [vmem:[#allocation7 + $0x18] sm:$0xff]
    %v203 = vld [vmem:[#allocation7 + $0x20] sm:$0xff]
    %v204 = vld [vmem:[#allocation7 + $0x28] sm:$0xff]
    %v205 = vld [vmem:[#allocation7 + $0x30] sm:$0xff]
    %v206 = vld [vmem:[#allocation7 + $0x38] sm:$0xff]
    %v207 = vld [vmem:[#allocation7 + $0x40] sm:$0xff]
    %v208 = vld [vmem:[#allocation7 + $0x48] sm:$0xff]
    %v209 = vld [vmem:[#allocation7 + $0x50] sm:$0xff]
    %v210 = vld [vmem:[#allocation7 + $0x58] sm:$0xff]
    %v211 = vld [vmem:[#allocation7 + $0x60] sm:$0xff]
    %v212 = vld [vmem:[#allocation7 + $0x68] sm:$0xff]
    %v213 = vld [vmem:[#allocation7 + $0x70] sm:$0xff]
    %v214 = vld [vmem:[#allocation7 + $0x78] sm:$0xff]
    %v215 = vld [vmem:[%s4] sm:$0x1]
    %v217 = vlaneseq
    %v218 = vshrl.u32 %v217, 7
    %v219 = vsub.s32 0, %v218
    %v220 = vrot.slane %v215, %v219
    %222 = vmatprep.subr.mxu0 0.0
    %223 = vmatpush1.msra.mxu0 %v199
    %224 = vmatprep.subr.mxu0 0.0
    %225 = vmatpush1.msra.mxu0 %v200
    %226 = vmatprep.subr.mxu0 0.0
    %227 = vmatpush1.msra.mxu0 %v201
    %228 = vmatprep.subr.mxu0 0.0
    %229 = vmatpush1.msra.mxu0 %v202
    %230 = vmatprep.subr.mxu0 0.0
    %231 = vmatpush1.msra.mxu0 %v203
    %232 = vmatprep.subr.mxu0 0.0
    %233 = vmatpush1.msra.mxu0 %v204
    %234 = vmatprep.subr.mxu0 0.0
    %235 = vmatpush1.msra.mxu0 %v205
    %236 = vmatprep.subr.mxu0 0.0
    %237 = vmatpush1.msra.mxu0 %v206
    %238 = vmatprep.subr.mxu0 0.0
    %239 = vmatpush1.msra.mxu0 %v207
    %240 = vmatprep.subr.mxu0 0.0
    %241 = vmatpush1.msra.mxu0 %v208
    %242 = vmatprep.subr.mxu0 0.0
    %243 = vmatpush1.msra.mxu0 %v209
    %244 = vmatprep.subr.mxu0 0.0
    %245 = vmatpush1.msra.mxu0 %v210
    %246 = vmatprep.subr.mxu0 0.0
    %247 = vmatpush1.msra.mxu0 %v211
    %248 = vmatprep.subr.mxu0 0.0
    %249 = vmatpush1.msra.mxu0 %v212
    %250 = vmatprep.subr.mxu0 0.0
    %251 = vmatpush1.msra.mxu0 %v213
    %252 = vmatprep.subr.mxu0 0.0
    %253 = vmatpush1.msra.mxu0 %v214
    %254 = vmatprep.subr.mxu0 0.0
    %255 = vmatpush1.msra.mxu0 0.0
    %256 = vmatprep.subr.mxu0 0.0
    %257 = vmatpush1.msra.mxu0 0.0
    %258 = vmatprep.subr.mxu0 0.0
    %259 = vmatpush1.msra.mxu0 0.0
    %260 = vmatprep.subr.mxu0 0.0
    %261 = vmatpush1.msra.mxu0 0.0
    %262 = vmatprep.subr.mxu0 0.0
    %263 = vmatpush1.msra.mxu0 0.0
    %264 = vmatprep.subr.mxu0 0.0
    %265 = vmatpush1.msra.mxu0 0.0
    %266 = vmatprep.subr.mxu0 0.0
    %267 = vmatpush1.msra.mxu0 0.0
    %268 = vmatprep.subr.mxu0 0.0
    %269 = vmatpush1.msra.mxu0 0.0
    %270 = vmatprep.subr.mxu0 0.0
    %271 = vmatpush1.msra.mxu0 0.0
    %272 = vmatprep.subr.mxu0 0.0
    %273 = vmatpush1.msra.mxu0 0.0
    %274 = vmatprep.subr.mxu0 0.0
    %275 = vmatpush1.msra.mxu0 0.0
    %276 = vmatprep.subr.mxu0 0.0
    %277 = vmatpush1.msra.mxu0 0.0
    %278 = vmatprep.subr.mxu0 0.0
    %279 = vmatpush1.msra.mxu0 0.0
    %280 = vmatprep.subr.mxu0 0.0
    %281 = vmatpush1.msra.mxu0 0.0
    %282 = vmatprep.subr.mxu0 0.0
    %283 = vmatpush1.msra.mxu0 0.0
    %284 = vmatprep.subr.mxu0 0.0
    %285 = vmatpush1.msra.mxu0 0.0
    %286 = vmatprep.mubr.f32.mxu0 0.0
    %287 = vmatmul.mubr.f32.gmra.mrb[0].mxu0 %v197
    %v288 = vpop.f32.mrb[0].mxu0
    %v289 = vadd.f32 %v220, %v288
    %v290 = vpop.f32.mrb[0].mxu0
    %291 = vmatprep.mubr.f32.mxu0 0.0
    %292 = vmatmul.mubr.f32.gmra.mrb[0].mxu0 %v198
    %v293 = vpop.f32.mrb[0].mxu0
    %v294 = vadd.f32 %v220, %v293
    %v295 = vpop.f32.mrb[0].mxu0
    %296 = vdwg.mxu0
    %297 = vst [vmem:[#allocation8] sm:$0xff] %v289
    %298 = vst [vmem:[#allocation8 + $0x8] sm:$0xff] %v294
    // Predicated region
    $region34: #{tpu_custom_call.1} parent=1 // pred_check
      _
    $region35: #{tpu_custom_call.1} parent=1 // pred_check_branch
      %300 = sbr.rel (0) target = $region37
    $region36: #{tpu_custom_call.1} parent=1 // pred_region
      %s302 = ssub.s32 256, 256
      %303 = vsyncadd [#allocation4], %s302
      %s304 = sshll.u32 [#allocation8], 4
      %s305 = int_to_ptr.vmem [resolvable:$true] %s304
      %310 = dma.vmem_to_hbm [thread:$0]  %s305, 256, %s5, [#allocation4], 128, 128, 8
    $region37: #{tpu_custom_call.1} parent=1 // pred_fallthru
      _
    // Predicated region
    $region38: #{tpu_custom_call.1} parent=1 // pred_check
      _
    $region39: #{tpu_custom_call.1} parent=1 // pred_check_branch
      %312 = sbr.rel (0) target = $region41
    $region40: #{tpu_custom_call.1} parent=1 // pred_region
      %313 = dma.done [#allocation4], 256
    $region41: #{tpu_custom_call.1} parent=1 // pred_fallthru
      _
    %314 = vsyncpa [#allocation3], 1
    %315 = vsyncpa [#allocation6], 1
    %316 = vsyncpa [#allocation4], 1

</llo_original>
